<compile_context>
chip_gen: v7x
topology: tpu7x:2x2x1
jax: 0.10.0
libtpu: 0.0.40
codegen_flags: <defaults>
</compile_context>

<pallas_src>
import numpy as np
import jax
import jax.numpy as jnp
from jax import lax
from jax.experimental import pallas as pl
from jax.experimental.pallas import tpu as pltpu

LANE = 128


def _round_up(v, m):
    return (v + m - 1) // m * m


# ---------------------------------------------------------------------------
# Pallas kernels
# ---------------------------------------------------------------------------
def _conv_stats_kernel(p_ref, w_ref, b_ref, y_ref, s_ref):
    """One M-tile of the stacked complex transposed-conv matmul.

    p_ref : (TM, Kp)   stacked [real | imag] im2col patches (compute dtype)
    w_ref : (Kp, C2p)  stacked complex weight matrix [[wr, wi], [-wi, wr]]
    b_ref : (1,  C2p)  complex bias (f32)
    y_ref : (TM, C2p)  conv output tile (f32, lane-dense real|imag)
    s_ref : (8,  C2p)  per-tile BN partials: row0 = sum, row1 = sum of squares
                       (rows 2..7 are never written / never read)
    """
    y = jnp.dot(p_ref[...], w_ref[...],
                preferred_element_type=jnp.float32) + b_ref[...]
    y_ref[...] = y
    # Unmasked partials; the M-padding rows contribute exactly `bias` per row
    # (patch rows are zero) and are subtracted in the JAX finalize.
    s_ref[0:1, :] = jnp.sum(y, axis=0, keepdims=True)
    s_ref[1:2, :] = jnp.sum(y * y, axis=0, keepdims=True)


def _bn_prelu_kernel(y_ref, scale_ref, shift_ref, alpha_ref, o_ref):
    """Elementwise BN apply (precomputed scale/shift) + PReLU."""
    z = y_ref[...] * scale_ref[...] + shift_ref[...]
    a = alpha_ref[0, 0]                     # PReLU slope from SMEM
    o_ref[...] = jnp.where(z >= 0.0, z, a * z)


# ---------------------------------------------------------------------------
# Sub-pixel (phase) decomposition of the transposed conv (per spatial dim)
# ---------------------------------------------------------------------------
def _phase_geometry(X, K, S, P, O):
    """y[o] = sum_{i,k : i*S + k - P == o} x[i] * w[k].

    Outputs sharing phase p = (o + P) % S use the tap subset w[p::S] and form
    a stride-1 correlation over x (no inserted zeros)."""
    phases = []
    for p in range(S):
        taps = list(range(p, K, S))
        zero_w = False
        if not taps:                       # stride > kernel: conv term is 0
            taps, zero_w = [0], True
        T = len(taps)
        m_min = -((p - P) // S)            # ceil((P - p) / S), always >= 0
        m_max = (O - 1 + P - p) // S
        n = m_max - m_min + 1
        if n <= 0:
            continue
        o0 = m_min * S + p - P             # first output index of this phase
        pad_lo = max(0, (T - 1) - m_min)
        pad_hi = max(0, m_max - (X - 1))
        base = pad_lo + m_min - (T - 1)
        phases.append(dict(taps=taps, T=T, n=n, o0=o0, zero_w=zero_w,
                           pad_lo=pad_lo, pad_hi=pad_hi, base=base))
    return phases


# ---------------------------------------------------------------------------
# Wrapper
# ---------------------------------------------------------------------------
def decoder_block_pallas(x, params, *, kernel_size, stride, padding,
                         output_padding, last_decoder=False,
                         compute_dtype=jnp.float32, tm=512,
                         vmem_limit_bytes=48 * 1024 * 1024):
    wr, wi, br, bi, gamma, beta, alpha = params
    N, Cin, H, W = x.shape
    KH, KW = kernel_size
    SH, SW = stride
    PH, PW = padding
    OPH, OPW = output_padding
    Ci2 = Cin // 2
    Co2 = wr.shape[1]
    C2 = 2 * Co2
    C2p = _round_up(C2, LANE)              # lane-dense output channels
    Ho = (H - 1) * SH - 2 * PH + KH + OPH
    Wo = (W - 1) * SW - 2 * PW + KW + OPW
    M_total = N * Ho * Wo

    x_r = jnp.transpose(x[:, :Ci2], (0, 2, 3, 1)).astype(jnp.float32)   # NHWC
    x_i = jnp.transpose(x[:, Ci2:], (0, 2, 3, 1)).astype(jnp.float32)

    ph_h = _phase_geometry(H, KH, SH, PH, Ho)
    ph_w = _phase_geometry(W, KW, SW, PW, Wo)

    # cConvTranspose bias: real = br - bi, imag = br + bi  (lane-padded)
    bias_valid = jnp.concatenate([br - bi, br + bi]).astype(jnp.float32)  # (C2,)
    bias_p = jnp.zeros((1, C2p), jnp.float32).at[0, :C2].set(bias_valid)

    cparams = pltpu.CompilerParams(dimension_semantics=("parallel",),
                                   vmem_limit_bytes=vmem_limit_bytes)

    sum_c = jnp.zeros((C2p,), jnp.float32)
    ssq_c = jnp.zeros((C2p,), jnp.float32)
    pad_rows_total = 0                     # padded rows seen by the conv kernel
    slabs = []                             # (gh, gw, y, nh, nw)

    for gh in ph_h:
        for gw in ph_w:
            Th, Tw = gh["T"], gw["T"]
            nh, nw = gh["n"], gw["n"]
            Mp = N * nh * nw

            if gh["zero_w"] or gw["zero_w"]:
                # Conv term is identically zero: output == bias everywhere.
                rows = _round_up(Mp, 8)
                y = jnp.broadcast_to(bias_p, (rows, C2p))
                sum_c = sum_c + Mp * bias_p[0]
                ssq_c = ssq_c + Mp * bias_p[0] * bias_p[0]
                slabs.append((gh, gw, y, nh, nw))
                continue

            half = Th * Tw * Ci2
            Kp = _round_up(2 * half, LANE)           # lane/MXU-dense contraction

            # Balanced M tiling (multiple of 8, no nearly-empty trailing tile).
            n_tiles = max(1, pl.cdiv(Mp, tm))
            tm_p = _round_up(pl.cdiv(Mp, n_tiles), 8)
            mp_pad = n_tiles * tm_p

            def im2col(xn):
                xp = jnp.pad(xn, ((0, 0),
                                  (gh["pad_lo"], gh["pad_hi"]),
                                  (gw["pad_lo"], gw["pad_hi"]),
                                  (0, 0)))
                cols = []
                for th in range(Th):
                    for tw in range(Tw):
                        cols.append(
                            xp[:, gh["base"] + th: gh["base"] + th + nh,
                                  gw["base"] + tw: gw["base"] + tw + nw, :])
                return jnp.concatenate(cols, axis=-1).reshape(Mp, half)

            def wmat(w):                             # per-phase taps, flipped
                wq = w[:, :, gh["taps"][::-1], :][:, :, :, gw["taps"][::-1]]
                return jnp.transpose(wq, (2, 3, 0, 1)).reshape(half, Co2)

            # One-shot padded stacked patch matrix: [pr | pi | 0], M padded.
            pr = im2col(x_r).astype(compute_dtype)
            pi = im2col(x_i).astype(compute_dtype)
            p_stack = jnp.zeros((mp_pad, Kp), compute_dtype)
            p_stack = lax.dynamic_update_slice(p_stack, pr, (0, 0))
            p_stack = lax.dynamic_update_slice(p_stack, pi, (0, half))

            # Stacked complex weights, zero-padded to (Kp, C2p).
            wr_m, wi_m = wmat(wr), wmat(wi)
            w_top = jnp.concatenate([wr_m, wi_m], axis=1)    # (half, C2)
            w_bot = jnp.concatenate([-wi_m, wr_m], axis=1)   # (half, C2)
            w_stack = jnp.zeros((Kp, C2p), jnp.float32)
            w_stack = lax.dynamic_update_slice(w_stack, w_top, (0, 0))
            w_stack = lax.dynamic_update_slice(w_stack, w_bot, (half, 0))
            w_stack = w_stack.astype(compute_dtype)

            y, stats = pl.pallas_call(
                _conv_stats_kernel,
                grid=(n_tiles,),
                in_specs=[pl.BlockSpec((tm_p, Kp), lambda i: (i, 0)),
                          pl.BlockSpec((Kp, C2p), lambda i: (0, 0)),   # resident
                          pl.BlockSpec((1, C2p), lambda i: (0, 0))],   # resident
                out_specs=(pl.BlockSpec((tm_p, C2p), lambda i: (i, 0)),
                           pl.BlockSpec((8, C2p), lambda i: (i, 0))),
                out_shape=(jax.ShapeDtypeStruct((mp_pad, C2p), jnp.float32),
                           jax.ShapeDtypeStruct((n_tiles * 8, C2p), jnp.float32)),
                compiler_params=cparams,
            )(p_stack, w_stack, bias_p)

            st = stats.reshape(n_tiles, 8, C2p)
            sum_c = sum_c + jnp.sum(st[:, 0], axis=0)
            ssq_c = ssq_c + jnp.sum(st[:, 1], axis=0)
            pad_rows_total += mp_pad - Mp
            slabs.append((gh, gw, y, nh, nw))

    if not last_decoder:
        # BN finalize: subtract closed-form pad-row contribution (pad rows have
        # y == bias exactly), then fold gamma/beta into scale/shift.
        b0 = bias_p[0]
        sum_c = sum_c - pad_rows_total * b0
        ssq_c = ssq_c - pad_rows_total * b0 * b0
        mean = sum_c / M_total
        var = jnp.maximum(ssq_c / M_total - mean * mean, 0.0)   # biased var
        inv = lax.rsqrt(var + 1e-5)
        g_p = jnp.zeros((C2p,), jnp.float32).at[:C2].set(gamma.astype(jnp.float32))
        b_p = jnp.zeros((C2p,), jnp.float32).at[:C2].set(beta.astype(jnp.float32))
        scale = (g_p * inv).reshape(1, C2p)
        shift = (b_p - mean * g_p * inv).reshape(1, C2p)
        alpha_s = jnp.asarray(alpha, jnp.float32).reshape(1, 1)

        new_slabs = []
        for gh, gw, y, nh, nw in slabs:
            rows = y.shape[0]
            # Mem-bound elementwise pass: use the largest row tile (<= 2048)
            # that evenly divides the slab, independent of the conv tile.
            if rows <= 2048:
                tm_bn = rows
            else:
                tm_bn = 8
                for cand in range(2048, 7, -8):
                    if rows % cand == 0:
                        tm_bn = cand
                        break
            y2 = pl.pallas_call(
                _bn_prelu_kernel,
                grid=(rows // tm_bn,),
                in_specs=[pl.BlockSpec((tm_bn, C2p), lambda i: (i, 0)),
                          pl.BlockSpec((1, C2p), lambda i: (0, 0)),
                          pl.BlockSpec((1, C2p), lambda i: (0, 0)),
                          pl.BlockSpec(memory_space=pltpu.MemorySpace.SMEM)],
                out_specs=pl.BlockSpec((tm_bn, C2p), lambda i: (i, 0)),
                out_shape=jax.ShapeDtypeStruct((rows, C2p), jnp.float32),
                compiler_params=cparams,
            )(y, scale, shift, alpha_s)
            new_slabs.append((gh, gw, y2, nh, nw))
        slabs = new_slabs

    # Interleave the phase slabs back into (N, Ho, Wo, C2), then go to NCHW.
    # TODO(synk): fuse this scatter + transpose into the BN out_spec layout.
    y_full = jnp.zeros((N, Ho, Wo, C2), jnp.float32)
    for gh, gw, y, nh, nw in slabs:
        Mp = N * nh * nw
        yb = y[:Mp, :C2].reshape(N, nh, nw, C2)
        y_full = y_full.at[:, gh["o0"]::SH, gw["o0"]::SW, :].set(yb)
    return jnp.transpose(y_full, (0, 3, 1, 2))     # (N, Cout, Ho, Wo) NCHW


# ---------------------------------------------------------------------------
# Pure-JAX reference (lax.conv_general_dilated transposed conv)
# ---------------------------------------------------------------------------
def decoder_block_ref(x, params, *, kernel_size, stride, padding,
                      output_padding, last_decoder=False):
    wr, wi, br, bi, gamma, beta, alpha = params
    N, Cin, H, W = x.shape
    KH, KW = kernel_size
    SH, SW = stride
    PH, PW = padding
    OPH, OPW = output_padding
    Ci2 = Cin // 2
    xr, xi = x[:, :Ci2], x[:, Ci2:]

    def tconv(inp, w):
        w_conv = jnp.transpose(jnp.flip(w, axis=(2, 3)), (1, 0, 2, 3))
        return lax.conv_general_dilated(
            inp, w_conv, window_strides=(1, 1),
            padding=[(KH - 1 - PH, KH - 1 - PH + OPH),
                     (KW - 1 - PW, KW - 1 - PW + OPW)],
            lhs_dilation=(SH, SW),
            dimension_numbers=('NCHW', 'OIHW', 'NCHW'))

    yr = tconv(xr, wr) - tconv(xi, wi) + (br - bi)[None, :, None, None]
    yi = tconv(xi, wr) + tconv(xr, wi) + (br + bi)[None, :, None, None]
    y = jnp.concatenate([yr, yi], axis=1)
    if not last_decoder:
        mean = jnp.mean(y, axis=(0, 2, 3), keepdims=True)
        var = jnp.mean((y - mean) ** 2, axis=(0, 2, 3), keepdims=True)
        y = ((y - mean) * lax.rsqrt(var + 1e-5) * gamma[None, :, None, None]
             + beta[None, :, None, None])
        y = jnp.where(y >= 0.0, y, alpha * y)
    return y


if __name__ == "__main__":
    # DCCRN-style decoder config, small shapes: x is (N, C, F, T)
    N, Cin, Cout = 2, 4, 4
    H, W = 16, 8
    kernel_size, stride = (5, 2), (2, 1)
    padding, output_padding = (2, 0), (1, 0)
    Ci2, Co2 = Cin // 2, Cout // 2

    key = jax.random.PRNGKey(0)
    ks = jax.random.split(key, 7)
    wr = 0.1 * jax.random.normal(ks[0], (Ci2, Co2) + kernel_size, jnp.float32)
    wi = 0.1 * jax.random.normal(ks[1], (Ci2, Co2) + kernel_size, jnp.float32)
    br = 0.1 * jax.random.normal(ks[2], (Co2,), jnp.float32)
    bi = 0.1 * jax.random.normal(ks[3], (Co2,), jnp.float32)
    gamma = 1.0 + 0.1 * jax.random.normal(ks[4], (Cout,), jnp.float32)
    beta = 0.1 * jax.random.normal(ks[5], (Cout,), jnp.float32)
    alpha = jnp.float32(0.25)                    # nn.PReLU() default init
    x = jax.random.normal(ks[6], (N, Cin, H, W), jnp.float32)
    params = (wr, wi, br, bi, gamma, beta, alpha)

    cfg = dict(kernel_size=kernel_size, stride=stride, padding=padding,
               output_padding=output_padding)
    Ho = (H - 1) * stride[0] - 2 * padding[0] + kernel_size[0] + output_padding[0]
    Wo = (W - 1) * stride[1] - 2 * padding[1] + kernel_size[1] + output_padding[1]

    # f32 compute path (tight check)
    y = jax.block_until_ready(
        decoder_block_pallas(x, params, last_decoder=False,
                             compute_dtype=jnp.float32, **cfg))
    assert y.shape == (N, Cout, Ho, Wo), y.shape
    y_ref = decoder_block_ref(x, params, last_decoder=False, **cfg)
    np.testing.assert_allclose(np.asarray(y), np.asarray(y_ref),
                               atol=2e-4, rtol=2e-4)

    # bf16 matmul path (f32 accumulation in the MXU) — looser tolerance
    y_bf = jax.block_until_ready(
        decoder_block_pallas(x, params, last_decoder=False,
                             compute_dtype=jnp.bfloat16, **cfg))
    np.testing.assert_allclose(np.asarray(y_bf), np.asarray(y_ref),
                               atol=1e-1, rtol=1e-1)

    # last_decoder path (transposed conv only, no BN / PReLU)
    y_last = jax.block_until_ready(
        decoder_block_pallas(x, params, last_decoder=True,
                             compute_dtype=jnp.float32, **cfg))
    y_last_ref = decoder_block_ref(x, params, last_decoder=True, **cfg)
    np.testing.assert_allclose(np.asarray(y_last), np.asarray(y_last_ref),
                               atol=2e-4, rtol=2e-4)

    print("KERNEL_OK")
</pallas_src>

<mosaic_0001>
module attributes {stable_mosaic.version = 11 : i64} {
  func.func @_conv_stats_kernel(%arg0: i32, %arg1: memref<288x128xf32, #tpu.memory_space<vmem>>, %arg2: memref<128x128xf32, #tpu.memory_space<vmem>>, %arg3: memref<1x128xf32, #tpu.memory_space<vmem>>, %arg4: memref<288x128xf32, #tpu.memory_space<vmem>>, %arg5: memref<8x128xf32, #tpu.memory_space<vmem>>) attributes {dimension_semantics = [#tpu.dimension_semantics<parallel>], iteration_bounds = array<i64: 1>, scalar_prefetch = 0 : i64, scratch_operands = 0 : i64, tpu.core_type = #tpu.core_type<tc>, window_params = [{transform_indices = @transform_0, window_bounds = array<i64: 288, 128>}, {pipeline_mode = #tpu.pipeline_mode<synchronous>, transform_indices = @transform_1, window_bounds = array<i64: 128, 128>}, {pipeline_mode = #tpu.pipeline_mode<synchronous>, transform_indices = @transform_2, window_bounds = array<i64: 1, 128>}, {transform_indices = @transform_3, window_bounds = array<i64: 288, 128>}, {transform_indices = @transform_4, window_bounds = array<i64: 8, 128>}]} {
    %c0 = arith.constant 0 : index
    %c0_0 = arith.constant 0 : index
    %0 = vector.load %arg1[%c0, %c0_0] : memref<288x128xf32, #tpu.memory_space<vmem>>, vector<288x128xf32>
    %c0_1 = arith.constant 0 : index
    %c0_2 = arith.constant 0 : index
    %1 = vector.load %arg2[%c0_1, %c0_2] : memref<128x128xf32, #tpu.memory_space<vmem>>, vector<128x128xf32>
    %cst = arith.constant dense<0.000000e+00> : vector<288x128xf32>
    %2 = tpu.matmul %0, %1, %cst {dimension_numbers = #tpu.dot_dimension_numbers<[1], [0], [0], [1], [0, 0, 1, 1], [], []>} : vector<288x128xf32>, vector<128x128xf32>, vector<288x128xf32> -> vector<288x128xf32>
    %c0_3 = arith.constant 0 : index
    %c0_4 = arith.constant 0 : index
    %3 = vector.load %arg3[%c0_3, %c0_4] : memref<1x128xf32, #tpu.memory_space<vmem>>, vector<1x128xf32>
    %4 = vector.broadcast %3 : vector<1x128xf32> to vector<288x128xf32>
    %5 = arith.addf %2, %4 : vector<288x128xf32>
    %c0_5 = arith.constant 0 : index
    %c0_6 = arith.constant 0 : index
    %6 = vector.load %arg4[%c0_5, %c0_6] : memref<288x128xf32, #tpu.memory_space<vmem>>, vector<288x128xf32>
    tpu.vector_store %arg4[%c0_5, %c0_6], %5 {strides = array<i32>} : memref<288x128xf32, #tpu.memory_space<vmem>>, vector<288x128xf32>,
    %cst_7 = arith.constant dense<0.000000e+00> : vector<128xf32>
    %7 = vector.multi_reduction <add>, %5, %cst_7 [0] : vector<288x128xf32> to vector<128xf32>
    %8 = vector.shape_cast %7 : vector<128xf32> to vector<1x128xf32>
    %c0_8 = arith.constant 0 : index
    %c0_9 = arith.constant 0 : index
    %9 = vector.load %arg5[%c0_8, %c0_9] : memref<8x128xf32, #tpu.memory_space<vmem>>, vector<1x128xf32>
    tpu.vector_store %arg5[%c0_8, %c0_9], %8 {strides = array<i32>} : memref<8x128xf32, #tpu.memory_space<vmem>>, vector<1x128xf32>,
    %10 = arith.mulf %5, %5 : vector<288x128xf32>
    %cst_10 = arith.constant dense<0.000000e+00> : vector<128xf32>
    %11 = vector.multi_reduction <add>, %10, %cst_10 [0] : vector<288x128xf32> to vector<128xf32>
    %12 = vector.shape_cast %11 : vector<128xf32> to vector<1x128xf32>
    %c1 = arith.constant 1 : index
    %c0_11 = arith.constant 0 : index
    %13 = vector.load %arg5[%c1, %c0_11] : memref<8x128xf32, #tpu.memory_space<vmem>>, vector<1x128xf32>
    tpu.vector_store %arg5[%c1, %c0_11], %12 {strides = array<i32>} : memref<8x128xf32, #tpu.memory_space<vmem>>, vector<1x128xf32>,
    return
  }
  func.func @transform_0(%arg0: i32) -> (i32, i32) {
    %c0_i32 = arith.constant 0 : i32
    %c0_i32_0 = arith.constant 0 : i32
    return %arg0, %c0_i32 : i32, i32
  }
  func.func @transform_1(%arg0: i32) -> (i32, i32) {
    %c0_i32 = arith.constant 0 : i32
    %c0_i32_0 = arith.constant 0 : i32
    %c0_i32_1 = arith.constant 0 : i32
    return %c0_i32, %c0_i32_0 : i32, i32
  }
  func.func @transform_2(%arg0: i32) -> (i32, i32) {
    %c0_i32 = arith.constant 0 : i32
    %c0_i32_0 = arith.constant 0 : i32
    %c0_i32_1 = arith.constant 0 : i32
    return %c0_i32, %c0_i32_0 : i32, i32
  }
  func.func @transform_3(%arg0: i32) -> (i32, i32) {
    %c0_i32 = arith.constant 0 : i32
    %c0_i32_0 = arith.constant 0 : i32
    return %arg0, %c0_i32 : i32, i32
  }
  func.func @transform_4(%arg0: i32) -> (i32, i32) {
    %c0_i32 = arith.constant 0 : i32
    %c0_i32_0 = arith.constant 0 : i32
    return %arg0, %c0_i32 : i32, i32
  }
}

</mosaic_0001>

<llo_original>
// kernel: tpu_custom_call.1
$region0: #{tpu_custom_call.1}
  #allocation0 [shape = 'u32[]', space=smem, size = 0x4, offset = 0x4, fixed_abs, tag = 'smem constant byte address 0x4 - core index']
  #allocation1 [shape = 'u32[144,128]{1,0:T(1,128)}', space=vmem, size = 0x12000, scoped, tag = 'internal scratch']
  %s0 = inlined_call_operand.hbm [shape: f32[288,128], index: 0, kind: input, shape index: {}]
  %s1 = inlined_call_operand.hbm [shape: f32[128,128], index: 1, kind: input, shape index: {}]
  %s2 = inlined_call_operand.vmem [shape: f32[1,128], index: 2, kind: input, shape index: {}]
  %s3 = inlined_call_operand.hbm [shape: f32[288,128], index: 3, kind: output, shape index: {0}]
  %s4 = inlined_call_operand.hbm [shape: f32[8,128], index: 4, kind: output, shape index: {1}]
  %5 = xla_tuple %s3, %s4
  %s6 = sld [smem:[#allocation0]]
  $region38: #{tpu_custom_call.1} parent=0
    _
  %s8 = ssub.s32 1, %s6
  %s9 = scalar_select 0, %s8, %s6
  $region1: #{tpu_custom_call.1} parent=0
    #allocation2 [shape = 'u8[147456]{0}', space=vmem, size = 0x24000, scoped, tag = 'input window, operand 0, single buffered']
    #allocation3 [shape = 's32[1]{0}', space=sflag, size = 0x4, scoped, tag = 'scoped memory for tpu_custom_call.1']
    #allocation4 [shape = 's32[1]{0}', space=sflag, size = 0x4, scoped, tag = 'scoped memory for tpu_custom_call.1']
    #allocation5 [shape = 'u8[65536]{0}', space=vmem, size = 0x10000, scoped, tag = 'input window, operand 1, single buffered']
    #allocation6 [shape = 's32[1]{0}', space=sflag, size = 0x4, scoped, tag = 'scoped memory for tpu_custom_call.1']
    #allocation7 [shape = 'u8[147456]{0}', space=vmem, size = 0x24000, scoped, tag = 'output window, operand 0, single buffered']
    #allocation8 [shape = 'u8[4096]{0}', space=vmem, size = 0x1000, scoped, tag = 'output window, operand 1, single buffered']
    #allocation9 [shape = 's32[1]{0}', space=sflag, size = 0x4, scoped, tag = 'scoped memory for tpu_custom_call.1']
    %10 = vsyncpa [#allocation3], 0
    %11 = vsyncpa [#allocation6], 0
    %12 = vsyncpa [#allocation4], 0
    %13 = vsyncpa [#allocation9], 0
    // Predicated region
    $region2: #{tpu_custom_call.1} parent=1 // pred_check
      _
    $region3: #{tpu_custom_call.1} parent=1 // pred_check_branch
      %15 = sbr.rel (0) target = $region5
    $region4: #{tpu_custom_call.1} parent=1 // pred_region
      %s17 = ssub.s32 4608, 4608
      %18 = vsyncadd [#allocation3], %s17
      %s19 = sshll.u32 [#allocation2], 4
      %s20 = int_to_ptr.vmem [resolvable:$true] %s19
      %25 = dma.hbm_to_vmem [thread:$0]  %s0, 4608, %s20, [#allocation3], 128, 128, 8
    $region5: #{tpu_custom_call.1} parent=1 // pred_fallthru
      _
    // Predicated region
    $region6: #{tpu_custom_call.1} parent=1 // pred_check
      _
    $region7: #{tpu_custom_call.1} parent=1 // pred_check_branch
      %27 = sbr.rel (0) target = $region9
    $region8: #{tpu_custom_call.1} parent=1 // pred_region
      %s29 = ssub.s32 2048, 2048
      %30 = vsyncadd [#allocation6], %s29
      %s31 = sshll.u32 [#allocation5], 4
      %s32 = int_to_ptr.vmem [resolvable:$true] %s31
      %37 = dma.hbm_to_vmem [thread:$0]  %s1, 2048, %s32, [#allocation6], 128, 128, 8
    $region9: #{tpu_custom_call.1} parent=1 // pred_fallthru
      _
    // Predicated region
    $region10: #{tpu_custom_call.1} parent=1 // pred_check
      _
    $region11: #{tpu_custom_call.1} parent=1 // pred_check_branch
      %39 = sbr.rel (0) target = $region13
    $region12: #{tpu_custom_call.1} parent=1 // pred_region
      _
    $region13: #{tpu_custom_call.1} parent=1 // pred_fallthru
      _
    // Predicated region
    $region14: #{tpu_custom_call.1} parent=1 // pred_check
      _
    $region15: #{tpu_custom_call.1} parent=1 // pred_check_branch
      %41 = sbr.rel (0) target = $region17
    $region16: #{tpu_custom_call.1} parent=1 // pred_region
      %42 = dma.done [#allocation3], 4608
    $region17: #{tpu_custom_call.1} parent=1 // pred_fallthru
      _
    // Predicated region
    $region18: #{tpu_custom_call.1} parent=1 // pred_check
      _
    $region19: #{tpu_custom_call.1} parent=1 // pred_check_branch
      %44 = sbr.rel (0) target = $region21
    $region20: #{tpu_custom_call.1} parent=1 // pred_region
      %45 = dma.done [#allocation6], 2048
    $region21: #{tpu_custom_call.1} parent=1 // pred_fallthru
      _
    %v46 = vld [vmem:[#allocation2] sm:$0xff]
    %v47 = vld [vmem:[#allocation2 + $0x8] sm:$0xff]
    %v48 = vld [vmem:[#allocation2 + $0x10] sm:$0xff]
    %v49 = vld [vmem:[#allocation2 + $0x18] sm:$0xff]
    %v50 = vld [vmem:[#allocation2 + $0x20] sm:$0xff]
    %v51 = vld [vmem:[#allocation2 + $0x28] sm:$0xff]
    %v52 = vld [vmem:[#allocation2 + $0x30] sm:$0xff]
    %v53 = vld [vmem:[#allocation2 + $0x38] sm:$0xff]
    %v54 = vld [vmem:[#allocation2 + $0x40] sm:$0xff]
    %v55 = vld [vmem:[#allocation2 + $0x48] sm:$0xff]
    %v56 = vld [vmem:[#allocation2 + $0x50] sm:$0xff]
    %v57 = vld [vmem:[#allocation2 + $0x58] sm:$0xff]
    %v58 = vld [vmem:[#allocation2 + $0x60] sm:$0xff]
    %v59 = vld [vmem:[#allocation2 + $0x68] sm:$0xff]
    %v60 = vld [vmem:[#allocation2 + $0x70] sm:$0xff]
    %v61 = vld [vmem:[#allocation2 + $0x78] sm:$0xff]
    %v62 = vld [vmem:[#allocation2 + $0x80] sm:$0xff]
    %v63 = vld [vmem:[#allocation2 + $0x88] sm:$0xff]
    %v64 = vld [vmem:[#allocation2 + $0x90] sm:$0xff]
    %v65 = vld [vmem:[#allocation2 + $0x98] sm:$0xff]
    %v66 = vld [vmem:[#allocation2 + $0xa0] sm:$0xff]
    %v67 = vld [vmem:[#allocation2 + $0xa8] sm:$0xff]
    %v68 = vld [vmem:[#allocation2 + $0xb0] sm:$0xff]
    %v69 = vld [vmem:[#allocation2 + $0xb8] sm:$0xff]
    %v70 = vld [vmem:[#allocation2 + $0xc0] sm:$0xff]
    %v71 = vld [vmem:[#allocation2 + $0xc8] sm:$0xff]
    %v72 = vld [vmem:[#allocation2 + $0xd0] sm:$0xff]
    %v73 = vld [vmem:[#allocation2 + $0xd8] sm:$0xff]
    %v74 = vld [vmem:[#allocation2 + $0xe0] sm:$0xff]
    %v75 = vld [vmem:[#allocation2 + $0xe8] sm:$0xff]
    %v76 = vld [vmem:[#allocation2 + $0xf0] sm:$0xff]
    %v77 = vld [vmem:[#allocation2 + $0xf8] sm:$0xff]
    %v78 = vld [vmem:[#allocation2 + $0x100] sm:$0xff]
    %v79 = vld [vmem:[#allocation2 + $0x108] sm:$0xff]
    %v80 = vld [vmem:[#allocation2 + $0x110] sm:$0xff]
    %v81 = vld [vmem:[#allocation2 + $0x118] sm:$0xff]
    %v82 = vld [vmem:[#allocation5] sm:$0xff]
    %v83 = vld [vmem:[#allocation5 + $0x8] sm:$0xff]
    %v84 = vld [vmem:[#allocation5 + $0x10] sm:$0xff]
    %v85 = vld [vmem:[#allocation5 + $0x18] sm:$0xff]
    %v86 = vld [vmem:[#allocation5 + $0x20] sm:$0xff]
    %v87 = vld [vmem:[#allocation5 + $0x28] sm:$0xff]
    %v88 = vld [vmem:[#allocation5 + $0x30] sm:$0xff]
    %v89 = vld [vmem:[#allocation5 + $0x38] sm:$0xff]
    %v90 = vld [vmem:[#allocation5 + $0x40] sm:$0xff]
    %v91 = vld [vmem:[#allocation5 + $0x48] sm:$0xff]
    %v92 = vld [vmem:[#allocation5 + $0x50] sm:$0xff]
    %v93 = vld [vmem:[#allocation5 + $0x58] sm:$0xff]
    %v94 = vld [vmem:[#allocation5 + $0x60] sm:$0xff]
    %v95 = vld [vmem:[#allocation5 + $0x68] sm:$0xff]
    %v96 = vld [vmem:[#allocation5 + $0x70] sm:$0xff]
    %v97 = vld [vmem:[#allocation5 + $0x78] sm:$0xff]
    %v98 = vld [vmem:[%s2] sm:$0x1]
    %v100 = vlaneseq
    %v101 = vshrl.u32 %v100, 7
    %v102 = vsub.s32 0, %v101
    %v103 = vrot.slane %v98, %v102
    %105 = vmatprep.subr.mxu0 0.0
    %106 = vmatpush1.msra.mxu0 %v82
    %107 = vmatprep.subr.mxu0 0.0
    %108 = vmatpush1.msra.mxu0 %v83
    %109 = vmatprep.subr.mxu0 0.0
    %110 = vmatpush1.msra.mxu0 %v84
    %111 = vmatprep.subr.mxu0 0.0
    %112 = vmatpush1.msra.mxu0 %v85
    %113 = vmatprep.subr.mxu0 0.0
    %114 = vmatpush1.msra.mxu0 %v86
    %115 = vmatprep.subr.mxu0 0.0
    %116 = vmatpush1.msra.mxu0 %v87
    %117 = vmatprep.subr.mxu0 0.0
    %118 = vmatpush1.msra.mxu0 %v88
    %119 = vmatprep.subr.mxu0 0.0
    %120 = vmatpush1.msra.mxu0 %v89
    %121 = vmatprep.subr.mxu0 0.0
    %122 = vmatpush1.msra.mxu0 %v90
    %123 = vmatprep.subr.mxu0 0.0
    %124 = vmatpush1.msra.mxu0 %v91
    %125 = vmatprep.subr.mxu0 0.0
    %126 = vmatpush1.msra.mxu0 %v92
    %127 = vmatprep.subr.mxu0 0.0
    %128 = vmatpush1.msra.mxu0 %v93
    %129 = vmatprep.subr.mxu0 0.0
    %130 = vmatpush1.msra.mxu0 %v94
    %131 = vmatprep.subr.mxu0 0.0
    %132 = vmatpush1.msra.mxu0 %v95
    %133 = vmatprep.subr.mxu0 0.0
    %134 = vmatpush1.msra.mxu0 %v96
    %135 = vmatprep.subr.mxu0 0.0
    %136 = vmatpush1.msra.mxu0 %v97
    %137 = vmatprep.subr.mxu0 0.0
    %138 = vmatpush1.msra.mxu0 0.0
    %139 = vmatprep.subr.mxu0 0.0
    %140 = vmatpush1.msra.mxu0 0.0
    %141 = vmatprep.subr.mxu0 0.0
    %142 = vmatpush1.msra.mxu0 0.0
    %143 = vmatprep.subr.mxu0 0.0
    %144 = vmatpush1.msra.mxu0 0.0
    %145 = vmatprep.subr.mxu0 0.0
    %146 = vmatpush1.msra.mxu0 0.0
    %147 = vmatprep.subr.mxu0 0.0
    %148 = vmatpush1.msra.mxu0 0.0
    %149 = vmatprep.subr.mxu0 0.0
    %150 = vmatpush1.msra.mxu0 0.0
    %151 = vmatprep.subr.mxu0 0.0
    %152 = vmatpush1.msra.mxu0 0.0
    %153 = vmatprep.subr.mxu0 0.0
    %154 = vmatpush1.msra.mxu0 0.0
    %155 = vmatprep.subr.mxu0 0.0
    %156 = vmatpush1.msra.mxu0 0.0
    %157 = vmatprep.subr.mxu0 0.0
    %158 = vmatpush1.msra.mxu0 0.0
    %159 = vmatprep.subr.mxu0 0.0
    %160 = vmatpush1.msra.mxu0 0.0
    %161 = vmatprep.subr.mxu0 0.0
    %162 = vmatpush1.msra.mxu0 0.0
    %163 = vmatprep.subr.mxu0 0.0
    %164 = vmatpush1.msra.mxu0 0.0
    %165 = vmatprep.subr.mxu0 0.0
    %166 = vmatpush1.msra.mxu0 0.0
    %167 = vmatprep.subr.mxu0 0.0
    %168 = vmatpush1.msra.mxu0 0.0
    %169 = vmatprep.mubr.f32.mxu0 0.0
    %170 = vmatmul.mubr.f32.gmra.mrb[0].mxu0 %v46
    %v171 = vpop.f32.mrb[0].mxu0
    %v172 = vadd.f32 %v103, %v171
    %v173 = vpop.f32.mrb[0].mxu0
    %174 = vmatprep.mubr.f32.mxu0 0.0
    %175 = vmatmul.mubr.f32.gmra.mrb[0].mxu0 %v47
    %v176 = vpop.f32.mrb[0].mxu0
    %v177 = vadd.f32 %v103, %v176
    %v178 = vpop.f32.mrb[0].mxu0
    %179 = vmatprep.mubr.f32.mxu0 0.0
    %180 = vmatmul.mubr.f32.gmra.mrb[0].mxu0 %v48
    %v181 = vpop.f32.mrb[0].mxu0
    %v182 = vadd.f32 %v103, %v181
    %v183 = vpop.f32.mrb[0].mxu0
    %184 = vmatprep.mubr.f32.mxu0 0.0
    %185 = vmatmul.mubr.f32.gmra.mrb[0].mxu0 %v49
    %v186 = vpop.f32.mrb[0].mxu0
    %v187 = vadd.f32 %v103, %v186
    %v188 = vpop.f32.mrb[0].mxu0
    %189 = vmatprep.mubr.f32.mxu0 0.0
    %190 = vmatmul.mubr.f32.gmra.mrb[0].mxu0 %v50
    %v191 = vpop.f32.mrb[0].mxu0
    %v192 = vadd.f32 %v103, %v191
    %v193 = vpop.f32.mrb[0].mxu0
    %194 = vmatprep.mubr.f32.mxu0 0.0
    %195 = vmatmul.mubr.f32.gmra.mrb[0].mxu0 %v51
    %v196 = vpop.f32.mrb[0].mxu0
    %v197 = vadd.f32 %v103, %v196
    %v198 = vpop.f32.mrb[0].mxu0
    %199 = vmatprep.mubr.f32.mxu0 0.0
    %200 = vmatmul.mubr.f32.gmra.mrb[0].mxu0 %v52
    %v201 = vpop.f32.mrb[0].mxu0
    %v202 = vadd.f32 %v103, %v201
    %v203 = vpop.f32.mrb[0].mxu0
    %204 = vmatprep.mubr.f32.mxu0 0.0
    %205 = vmatmul.mubr.f32.gmra.mrb[0].mxu0 %v53
    %v206 = vpop.f32.mrb[0].mxu0
    %v207 = vadd.f32 %v103, %v206
    %v208 = vpop.f32.mrb[0].mxu0
    %209 = vmatprep.mubr.f32.mxu0 0.0
    %210 = vmatmul.mubr.f32.gmra.mrb[0].mxu0 %v54
    %v211 = vpop.f32.mrb[0].mxu0
    %v212 = vadd.f32 %v103, %v211
    %v213 = vpop.f32.mrb[0].mxu0
    %214 = vmatprep.mubr.f32.mxu0 0.0
    %215 = vmatmul.mubr.f32.gmra.mrb[0].mxu0 %v55
    %v216 = vpop.f32.mrb[0].mxu0
    %v217 = vadd.f32 %v103, %v216
    %v218 = vpop.f32.mrb[0].mxu0
    %219 = vmatprep.mubr.f32.mxu0 0.0
    %220 = vmatmul.mubr.f32.gmra.mrb[0].mxu0 %v56
    %v221 = vpop.f32.mrb[0].mxu0
    %v222 = vadd.f32 %v103, %v221
    %v223 = vpop.f32.mrb[0].mxu0
    %224 = vmatprep.mubr.f32.mxu0 0.0
    %225 = vmatmul.mubr.f32.gmra.mrb[0].mxu0 %v57
    %v226 = vpop.f32.mrb[0].mxu0
    %v227 = vadd.f32 %v103, %v226
    %v228 = vpop.f32.mrb[0].mxu0
    %229 = vmatprep.mubr.f32.mxu0 0.0
    %230 = vmatmul.mubr.f32.gmra.mrb[0].mxu0 %v58
    %v231 = vpop.f32.mrb[0].mxu0
    %v232 = vadd.f32 %v103, %v231
    %v233 = vpop.f32.mrb[0].mxu0
    %234 = vmatprep.mubr.f32.mxu0 0.0
    %235 = vmatmul.mubr.f32.gmra.mrb[0].mxu0 %v59
    %v236 = vpop.f32.mrb[0].mxu0
    %v237 = vadd.f32 %v103, %v236
    %v238 = vpop.f32.mrb[0].mxu0
    %239 = vmatprep.mubr.f32.mxu0 0.0
    %240 = vmatmul.mubr.f32.gmra.mrb[0].mxu0 %v60
    %v241 = vpop.f32.mrb[0].mxu0
    %v242 = vadd.f32 %v103, %v241
    %v243 = vpop.f32.mrb[0].mxu0
    %244 = vmatprep.mubr.f32.mxu0 0.0
    %245 = vmatmul.mubr.f32.gmra.mrb[0].mxu0 %v61
    %v246 = vpop.f32.mrb[0].mxu0
    %v247 = vadd.f32 %v103, %v246
    %v248 = vpop.f32.mrb[0].mxu0
    %249 = vmatprep.mubr.f32.mxu0 0.0
    %250 = vmatmul.mubr.f32.gmra.mrb[0].mxu0 %v62
    %v251 = vpop.f32.mrb[0].mxu0
    %v252 = vadd.f32 %v103, %v251
    %v253 = vpop.f32.mrb[0].mxu0
    %254 = vmatprep.mubr.f32.mxu0 0.0
    %255 = vmatmul.mubr.f32.gmra.mrb[0].mxu0 %v63
    %v256 = vpop.f32.mrb[0].mxu0
    %v257 = vadd.f32 %v103, %v256
    %v258 = vpop.f32.mrb[0].mxu0
    %259 = vmatprep.mubr.f32.mxu0 0.0
    %260 = vmatmul.mubr.f32.gmra.mrb[0].mxu0 %v64
    %v261 = vpop.f32.mrb[0].mxu0
    %v262 = vadd.f32 %v103, %v261
    %v263 = vpop.f32.mrb[0].mxu0
    %264 = vmatprep.mubr.f32.mxu0 0.0
    %265 = vmatmul.mubr.f32.gmra.mrb[0].mxu0 %v65
    %v266 = vpop.f32.mrb[0].mxu0
    %v267 = vadd.f32 %v103, %v266
    %v268 = vpop.f32.mrb[0].mxu0
    %269 = vmatprep.mubr.f32.mxu0 0.0
    %270 = vmatmul.mubr.f32.gmra.mrb[0].mxu0 %v66
    %v271 = vpop.f32.mrb[0].mxu0
    %v272 = vadd.f32 %v103, %v271
    %v273 = vpop.f32.mrb[0].mxu0
    %274 = vmatprep.mubr.f32.mxu0 0.0
    %275 = vmatmul.mubr.f32.gmra.mrb[0].mxu0 %v67
    %v276 = vpop.f32.mrb[0].mxu0
    %v277 = vadd.f32 %v103, %v276
    %v278 = vpop.f32.mrb[0].mxu0
    %279 = vmatprep.mubr.f32.mxu0 0.0
    %280 = vmatmul.mubr.f32.gmra.mrb[0].mxu0 %v68
    %v281 = vpop.f32.mrb[0].mxu0
    %v282 = vadd.f32 %v103, %v281
    %v283 = vpop.f32.mrb[0].mxu0
    %284 = vmatprep.mubr.f32.mxu0 0.0
    %285 = vmatmul.mubr.f32.gmra.mrb[0].mxu0 %v69
    %v286 = vpop.f32.mrb[0].mxu0
    %v287 = vadd.f32 %v103, %v286
    %v288 = vpop.f32.mrb[0].mxu0
    %289 = vmatprep.mubr.f32.mxu0 0.0
    %290 = vmatmul.mubr.f32.gmra.mrb[0].mxu0 %v70
    %v291 = vpop.f32.mrb[0].mxu0
    %v292 = vadd.f32 %v103, %v291
    %v293 = vpop.f32.mrb[0].mxu0
    %294 = vmatprep.mubr.f32.mxu0 0.0
    %295 = vmatmul.mubr.f32.gmra.mrb[0].mxu0 %v71
    %v296 = vpop.f32.mrb[0].mxu0
    %v297 = vadd.f32 %v103, %v296
    %v298 = vpop.f32.mrb[0].mxu0
    %299 = vmatprep.mubr.f32.mxu0 0.0
    %300 = vmatmul.mubr.f32.gmra.mrb[0].mxu0 %v72
    %v301 = vpop.f32.mrb[0].mxu0
    %v302 = vadd.f32 %v103, %v301
    %v303 = vpop.f32.mrb[0].mxu0
    %304 = vmatprep.mubr.f32.mxu0 0.0
    %305 = vmatmul.mubr.f32.gmra.mrb[0].mxu0 %v73
    %v306 = vpop.f32.mrb[0].mxu0
    %v307 = vadd.f32 %v103, %v306
    %v308 = vpop.f32.mrb[0].mxu0
    %309 = vmatprep.mubr.f32.mxu0 0.0
    %310 = vmatmul.mubr.f32.gmra.mrb[0].mxu0 %v74
    %v311 = vpop.f32.mrb[0].mxu0
    %v312 = vadd.f32 %v103, %v311
    %v313 = vpop.f32.mrb[0].mxu0
    %314 = vmatprep.mubr.f32.mxu0 0.0
    %315 = vmatmul.mubr.f32.gmra.mrb[0].mxu0 %v75
    %v316 = vpop.f32.mrb[0].mxu0
    %v317 = vadd.f32 %v103, %v316
    %v318 = vpop.f32.mrb[0].mxu0
    %319 = vmatprep.mubr.f32.mxu0 0.0
    %320 = vmatmul.mubr.f32.gmra.mrb[0].mxu0 %v76
    %v321 = vpop.f32.mrb[0].mxu0
    %v322 = vadd.f32 %v103, %v321
    %v323 = vpop.f32.mrb[0].mxu0
    %324 = vmatprep.mubr.f32.mxu0 0.0
    %325 = vmatmul.mubr.f32.gmra.mrb[0].mxu0 %v77
    %v326 = vpop.f32.mrb[0].mxu0
    %v327 = vadd.f32 %v103, %v326
    %v328 = vpop.f32.mrb[0].mxu0
    %329 = vmatprep.mubr.f32.mxu0 0.0
    %330 = vmatmul.mubr.f32.gmra.mrb[0].mxu0 %v78
    %v331 = vpop.f32.mrb[0].mxu0
    %v332 = vadd.f32 %v103, %v331
    %v333 = vpop.f32.mrb[0].mxu0
    %334 = vmatprep.mubr.f32.mxu0 0.0
    %335 = vmatmul.mubr.f32.gmra.mrb[0].mxu0 %v79
    %v336 = vpop.f32.mrb[0].mxu0
    %v337 = vadd.f32 %v103, %v336
    %v338 = vpop.f32.mrb[0].mxu0
    %339 = vmatprep.mubr.f32.mxu0 0.0
    %340 = vmatmul.mubr.f32.gmra.mrb[0].mxu0 %v80
    %v341 = vpop.f32.mrb[0].mxu0
    %v342 = vadd.f32 %v103, %v341
    %v343 = vpop.f32.mrb[0].mxu0
    %344 = vmatprep.mubr.f32.mxu0 0.0
    %345 = vmatmul.mubr.f32.gmra.mrb[0].mxu0 %v81
    %v346 = vpop.f32.mrb[0].mxu0
    %v347 = vadd.f32 %v103, %v346
    %v348 = vpop.f32.mrb[0].mxu0
    %349 = vdwg.mxu0
    %350 = vst [vmem:[#allocation7] sm:$0xff] %v172
    %351 = vst [vmem:[#allocation7 + $0x8] sm:$0xff] %v177
    %352 = vst [vmem:[#allocation7 + $0x10] sm:$0xff] %v182
    %353 = vst [vmem:[#allocation7 + $0x18] sm:$0xff] %v187
    %354 = vst [vmem:[#allocation7 + $0x20] sm:$0xff] %v192
    %355 = vst [vmem:[#allocation7 + $0x28] sm:$0xff] %v197
    %356 = vst [vmem:[#allocation7 + $0x30] sm:$0xff] %v202
    %357 = vst [vmem:[#allocation7 + $0x38] sm:$0xff] %v207
    %358 = vst [vmem:[#allocation7 + $0x40] sm:$0xff] %v212
    %359 = vst [vmem:[#allocation7 + $0x48] sm:$0xff] %v217
    %360 = vst [vmem:[#allocation7 + $0x50] sm:$0xff] %v222
    %361 = vst [vmem:[#allocation7 + $0x58] sm:$0xff] %v227
    %362 = vst [vmem:[#allocation7 + $0x60] sm:$0xff] %v232
    %363 = vst [vmem:[#allocation7 + $0x68] sm:$0xff] %v237
    %364 = vst [vmem:[#allocation7 + $0x70] sm:$0xff] %v242
    %365 = vst [vmem:[#allocation7 + $0x78] sm:$0xff] %v247
    %366 = vst [vmem:[#allocation7 + $0x80] sm:$0xff] %v252
    %367 = vst [vmem:[#allocation7 + $0x88] sm:$0xff] %v257
    %368 = vst [vmem:[#allocation7 + $0x90] sm:$0xff] %v262
    %369 = vst [vmem:[#allocation7 + $0x98] sm:$0xff] %v267
    %370 = vst [vmem:[#allocation7 + $0xa0] sm:$0xff] %v272
    %371 = vst [vmem:[#allocation7 + $0xa8] sm:$0xff] %v277
    %372 = vst [vmem:[#allocation7 + $0xb0] sm:$0xff] %v282
    %373 = vst [vmem:[#allocation7 + $0xb8] sm:$0xff] %v287
    %374 = vst [vmem:[#allocation7 + $0xc0] sm:$0xff] %v292
    %375 = vst [vmem:[#allocation7 + $0xc8] sm:$0xff] %v297
    %376 = vst [vmem:[#allocation7 + $0xd0] sm:$0xff] %v302
    %377 = vst [vmem:[#allocation7 + $0xd8] sm:$0xff] %v307
    %378 = vst [vmem:[#allocation7 + $0xe0] sm:$0xff] %v312
    %379 = vst [vmem:[#allocation7 + $0xe8] sm:$0xff] %v317
    %380 = vst [vmem:[#allocation7 + $0xf0] sm:$0xff] %v322
    %381 = vst [vmem:[#allocation7 + $0xf8] sm:$0xff] %v327
    %382 = vst [vmem:[#allocation7 + $0x100] sm:$0xff] %v332
    %383 = vst [vmem:[#allocation7 + $0x108] sm:$0xff] %v337
    %384 = vst [vmem:[#allocation7 + $0x110] sm:$0xff] %v342
    %385 = vst [vmem:[#allocation7 + $0x118] sm:$0xff] %v347
    %v386 = vadd.f32 %v172, %v177
    %v387 = vadd.f32 %v386, %v182
    %v388 = vadd.f32 %v387, %v187
    %v389 = vadd.f32 %v388, %v192
    %v390 = vadd.f32 %v389, %v197
    %v391 = vadd.f32 %v390, %v202
    %v392 = vadd.f32 %v391, %v207
    %v393 = vadd.f32 %v392, %v212
    %v394 = vadd.f32 %v393, %v217
    %v395 = vadd.f32 %v394, %v222
    %v396 = vadd.f32 %v395, %v227
    %v397 = vadd.f32 %v396, %v232
    %v398 = vadd.f32 %v397, %v237
    %v399 = vadd.f32 %v398, %v242
    %v400 = vadd.f32 %v399, %v247
    %v401 = vadd.f32 %v400, %v252
    %v402 = vadd.f32 %v401, %v257
    %v403 = vadd.f32 %v402, %v262
    %v404 = vadd.f32 %v403, %v267
    %v405 = vadd.f32 %v404, %v272
    %v406 = vadd.f32 %v405, %v277
    %v407 = vadd.f32 %v406, %v282
    %v408 = vadd.f32 %v407, %v287
    %v409 = vadd.f32 %v408, %v292
    %v410 = vadd.f32 %v409, %v297
    %v411 = vadd.f32 %v410, %v302
    %v412 = vadd.f32 %v411, %v307
    %v413 = vadd.f32 %v412, %v312
    %v414 = vadd.f32 %v413, %v317
    %v415 = vadd.f32 %v414, %v322
    %v416 = vadd.f32 %v415, %v327
    %v417 = vadd.f32 %v416, %v332
    %v418 = vadd.f32 %v417, %v337
    %v419 = vadd.f32 %v418, %v342
    %v420 = vadd.f32 %v419, %v347
    %v421 = vrot.slane %v420, 4
    %v422 = vadd.f32 %v420, %v421
    %v423 = vrot.slane %v422, 2
    %v424 = vadd.f32 %v422, %v423
    %v425 = vrot.slane %v424, 1
    %v426 = vadd.f32 %v424, %v425
    %427 = vst [vmem:[#allocation8] sm:$0x1] %v426
    %v428 = vmul.f32 %v172, %v172
    %v429 = vmul.f32 %v177, %v177
    %v430 = vmul.f32 %v182, %v182
    %v431 = vmul.f32 %v187, %v187
    %v432 = vmul.f32 %v192, %v192
    %v433 = vmul.f32 %v197, %v197
    %v434 = vmul.f32 %v202, %v202
    %v435 = vmul.f32 %v207, %v207
    %v436 = vmul.f32 %v212, %v212
    %v437 = vmul.f32 %v217, %v217
    %v438 = vmul.f32 %v222, %v222
    %v439 = vmul.f32 %v227, %v227
    %v440 = vmul.f32 %v232, %v232
    %v441 = vmul.f32 %v237, %v237
    %v442 = vmul.f32 %v242, %v242
    %v443 = vmul.f32 %v247, %v247
    %v444 = vmul.f32 %v252, %v252
    %v445 = vmul.f32 %v257, %v257
    %v446 = vmul.f32 %v262, %v262
    %v447 = vmul.f32 %v267, %v267
    %v448 = vmul.f32 %v272, %v272
    %v449 = vmul.f32 %v277, %v277
    %v450 = vmul.f32 %v282, %v282
    %v451 = vmul.f32 %v287, %v287
    %v452 = vmul.f32 %v292, %v292
    %v453 = vmul.f32 %v297, %v297
    %v454 = vmul.f32 %v302, %v302
    %v455 = vmul.f32 %v307, %v307
    %v456 = vmul.f32 %v312, %v312
    %v457 = vmul.f32 %v317, %v317
    %v458 = vmul.f32 %v322, %v322
    %v459 = vmul.f32 %v327, %v327
    %v460 = vmul.f32 %v332, %v332
    %v461 = vmul.f32 %v337, %v337
    %v462 = vmul.f32 %v342, %v342
    %v463 = vmul.f32 %v347, %v347
    %v464 = vadd.f32 %v428, %v429
    %v465 = vadd.f32 %v464, %v430
    %v466 = vadd.f32 %v465, %v431
    %v467 = vadd.f32 %v466, %v432
    %v468 = vadd.f32 %v467, %v433
    %v469 = vadd.f32 %v468, %v434
    %v470 = vadd.f32 %v469, %v435
    %v471 = vadd.f32 %v470, %v436
    %v472 = vadd.f32 %v471, %v437
    %v473 = vadd.f32 %v472, %v438
    %v474 = vadd.f32 %v473, %v439
    %v475 = vadd.f32 %v474, %v440
    %v476 = vadd.f32 %v475, %v441
    %v477 = vadd.f32 %v476, %v442
    %v478 = vadd.f32 %v477, %v443
    %v479 = vadd.f32 %v478, %v444
    %v480 = vadd.f32 %v479, %v445
    %v481 = vadd.f32 %v480, %v446
    %v482 = vadd.f32 %v481, %v447
    %v483 = vadd.f32 %v482, %v448
    %v484 = vadd.f32 %v483, %v449
    %v485 = vadd.f32 %v484, %v450
    %v486 = vadd.f32 %v485, %v451
    %v487 = vadd.f32 %v486, %v452
    %v488 = vadd.f32 %v487, %v453
    %v489 = vadd.f32 %v488, %v454
    %v490 = vadd.f32 %v489, %v455
    %v491 = vadd.f32 %v490, %v456
    %v492 = vadd.f32 %v491, %v457
    %v493 = vadd.f32 %v492, %v458
    %v494 = vadd.f32 %v493, %v459
    %v495 = vadd.f32 %v494, %v460
    %v496 = vadd.f32 %v495, %v461
    %v497 = vadd.f32 %v496, %v462
    %v498 = vadd.f32 %v497, %v463
    %v499 = vrot.slane %v498, 4
    %v500 = vadd.f32 %v498, %v499
    %v501 = vrot.slane %v500, 2
    %v502 = vadd.f32 %v500, %v501
    %v503 = vrot.slane %v502, 1
    %v504 = vadd.f32 %v502, %v503
    %505 = vst [vmem:[#allocation8 + $0x1] sm:$0x1] %v504
    // Predicated region
    $region22: #{tpu_custom_call.1} parent=1 // pred_check
      _
    $region23: #{tpu_custom_call.1} parent=1 // pred_check_branch
      %507 = sbr.rel (0) target = $region25
    $region24: #{tpu_custom_call.1} parent=1 // pred_region
      %s509 = ssub.s32 4608, 4608
      %510 = vsyncadd [#allocation4], %s509
      %s511 = sshll.u32 [#allocation7], 4
      %s512 = int_to_ptr.vmem [resolvable:$true] %s511
      %517 = dma.vmem_to_hbm [thread:$0]  %s512, 4608, %s3, [#allocation4], 128, 128, 8
    $region25: #{tpu_custom_call.1} parent=1 // pred_fallthru
      _
    // Predicated region
    $region26: #{tpu_custom_call.1} parent=1 // pred_check
      _
    $region27: #{tpu_custom_call.1} parent=1 // pred_check_branch
      %519 = sbr.rel (0) target = $region29
    $region28: #{tpu_custom_call.1} parent=1 // pred_region
      %s521 = ssub.s32 128, 128
      %522 = vsyncadd [#allocation9], %s521
      %s524 = sshll.u32 [#allocation8], 4
      %s525 = int_to_ptr.vmem [resolvable:$true] %s524
      %527 = dma.vmem_to_hbm [thread:$0]  %s525, 128, %s4, [#allocation9]
    $region29: #{tpu_custom_call.1} parent=1 // pred_fallthru
      _
    // Predicated region
    $region30: #{tpu_custom_call.1} parent=1 // pred_check
      _
    $region31: #{tpu_custom_call.1} parent=1 // pred_check_branch
      %529 = sbr.rel (0) target = $region33
    $region32: #{tpu_custom_call.1} parent=1 // pred_region
      %530 = dma.done [#allocation4], 4608
    $region33: #{tpu_custom_call.1} parent=1 // pred_fallthru
      _
    // Predicated region
    $region34: #{tpu_custom_call.1} parent=1 // pred_check
      _
    $region35: #{tpu_custom_call.1} parent=1 // pred_check_branch
      %532 = sbr.rel (0) target = $region37
    $region36: #{tpu_custom_call.1} parent=1 // pred_region
      %533 = dma.done [#allocation9], 128
    $region37: #{tpu_custom_call.1} parent=1 // pred_fallthru
      _
    %534 = vsyncpa [#allocation3], 1
    %535 = vsyncpa [#allocation6], 1
    %536 = vsyncpa [#allocation4], 1
    %537 = vsyncpa [#allocation9], 1

</llo_original>
